<compile_context>
chip_gen: v7x
topology: tpu7x:2x2x1
jax: 0.10.0
libtpu: 0.0.40
codegen_flags: <defaults>
</compile_context>

<pallas_src>
import functools

import jax
import jax.numpy as jnp
from jax.experimental import pallas as pl
from jax.experimental.pallas import tpu as pltpu

_LANE = 128


def _ls_ce_kernel(*refs, smoothing, ignore_index, n_rows, vocab,
                  tile_n, tile_v, use_mxu):
    if use_mxu:
        tgt_ref, lp_ref, ones_ref, out_ref, nll_acc, sm_acc = refs
    else:
        tgt_ref, lp_ref, out_ref, nll_acc, sm_acc = refs
        ones_ref = None

    i = pl.program_id(0)                       # row tile (parallel)
    j = pl.program_id(1)                       # vocab tile (reduction)

    @pl.when(j == 0)
    def _init():
        nll_acc[...] = jnp.zeros_like(nll_acc)
        sm_acc[...] = jnp.zeros_like(sm_acc)

    lp = lp_ref[...]                           # (tile_n, tile_v), native dtype
    tgt = tgt_ref[...]                         # (tile_n, 1) int32
    v_start = j * tile_v
    zero = lp.dtype.type(0)

    # Single lane-index strip; broadcast happens inside the compares.
    col_ids = jax.lax.broadcasted_iota(jnp.int32, (1, tile_v), 1)

    # nll: gather(dim=-1, index=target) as one-hot select + lane sum.
    # The sum is exact in native dtype (at most one nonzero per row), so only
    # the (tile_n, 1) result is widened to f32. No ragged-vocab mask needed:
    # for valid rows the selected lane is always in range; selects are NaN-safe.
    onehot = col_ids == (tgt - v_start)
    nll_part = -jnp.sum(jnp.where(onehot, lp, zero),
                        axis=-1, keepdims=True).astype(jnp.float32)

    # smooth: full-vocab sum. Out-of-range lanes of a ragged last vocab tile
    # must be zeroed here (MXU would sum garbage; VPU sum would too).
    lp_s = lp
    if vocab % tile_v != 0:
        lp_s = jnp.where(col_ids < (vocab - v_start), lp, zero)
    if use_mxu:
        sm_full = jax.lax.dot_general(
            lp_s, ones_ref[...], (((1,), (0,)), ((), ())),
            preferred_element_type=jnp.float32)          # (tile_n, 128) f32
        sm_part = -sm_full[:, :1]
    else:
        sm_part = -jnp.sum(lp_s, axis=-1, keepdims=True, dtype=jnp.float32)

    # Per-row validity: ragged last row tile and/or ignore_index padding.
    valid = None
    if n_rows % tile_n != 0:
        row_ids = i * tile_n + jax.lax.broadcasted_iota(
            jnp.int32, (tile_n, 1), 0)
        valid = row_ids < n_rows
    if ignore_index is not None:
        keep = tgt != ignore_index
        valid = keep if valid is None else jnp.logical_and(valid, keep)

    if valid is None:
        nll_acc[...] += nll_part
        sm_acc[...] += sm_part
    else:
        nll_acc[...] += jnp.where(valid, nll_part, 0.0)
        sm_acc[...] += jnp.where(valid, sm_part, 0.0)

    @pl.when(j == pl.num_programs(1) - 1)
    def _finish():
        eps_i = smoothing / vocab
        total = ((1.0 - smoothing) * jnp.sum(nll_acc[...])
                 + eps_i * jnp.sum(sm_acc[...]))
        # lane-dense (8,128) block per row tile; wrapper reads [i, 0, 0]
        out_ref[...] = jnp.zeros(out_ref.shape, jnp.float32) + total


def _vmem_budget_bytes():
    cap = 64 * 1024 * 1024
    try:
        info = pltpu.get_tpu_info()
        cap = int(getattr(info, "vmem_capacity_bytes", cap) or cap)
    except Exception:
        pass
    # Leave headroom for compiler-internal scratch:
    # ~48 MiB on v7x (64 MiB VMEM), ~96 MiB on v5e/v6e (128 MiB VMEM).
    return (cap * 3) // 4


def _choose_tile_v(vocab):
    if vocab <= 8192:
        return vocab
    for cand in (8192, 4096, 2048):
        if vocab % cand == 0:
            return cand
    return 8192  # ragged last vocab tile (multiple of 128), masked in-kernel


def _choose_tile_n(n_rows, tile_v, itemsize, target_bytes):
    if n_rows < 16:
        return max(n_rows, 1)                  # single full-rows block
    cap = target_bytes // max(1, tile_v * itemsize)
    cap = max(16, (min(int(cap), 4096) // 16) * 16)
    return max(16, min(cap, (n_rows // 16) * 16))


def label_smoothed_cross_entropy(lprobs, target, *, smoothing,
                                 ignore_index=None, reduce=True,
                                 tile_n=None, tile_v=None):
    """Pallas TPU implementation of LabelSmoothedCrossEntropyCriterion.forward.

    lprobs: (..., V) log-probabilities (any float dtype; DMA'd natively).
    target: (...) integer class indices (same leading dims as lprobs).
    Returns a scalar float32 loss (reduce=True path).
    """
    if not reduce:
        # TODO(synk): per-position (unreduced) loss output path not implemented in-kernel.
        raise NotImplementedError("reduce=False path not implemented")

    vocab = lprobs.shape[-1]
    lp2 = lprobs.reshape(-1, vocab)            # native dtype: no pad, no cast
    tgt2 = target.reshape(-1, 1).astype(jnp.int32)
    n_rows = lp2.shape[0]
    itemsize = jnp.dtype(lp2.dtype).itemsize

    budget = _vmem_budget_bytes()
    target_bytes = min(16 * 1024 * 1024, budget // 4)

    if tile_v is None:
        tile_v = _choose_tile_v(vocab)
    if tile_n is None:
        tile_n = _choose_tile_n(n_rows, tile_v, itemsize, target_bytes)

    n_row_tiles = -(-n_rows // tile_n)
    n_vocab_tiles = -(-vocab // tile_v)
    use_mxu = lp2.dtype == jnp.bfloat16        # MXU smooth-sum offload (f32 acc)

    in_specs = [
        pl.BlockSpec((tile_n, 1), lambda i, j: (i, 0)),        # targets
        pl.BlockSpec((tile_n, tile_v), lambda i, j: (i, j)),   # lprobs
    ]
    args = [tgt2, lp2]
    ones_bytes = 0
    if use_mxu:
        in_specs.append(pl.BlockSpec((tile_v, _LANE), lambda i, j: (0, 0)))
        args.append(jnp.ones((tile_v, _LANE), lp2.dtype))      # resident, 1 DMA
        ones_bytes = tile_v * _LANE * itemsize

    lp_block_bytes = tile_n * tile_v * itemsize
    tgt_block_bytes = tile_n * _LANE * 4       # (tile_n, 1) pads to 128 lanes
    acc_bytes = 2 * tile_n * _LANE * 4
    needed = (2 * lp_block_bytes + 2 * tgt_block_bytes + 2 * ones_bytes
              + acc_bytes + 4 * 1024 * 1024)
    vmem_limit = int(min(budget, max(32 * 1024 * 1024, needed)))

    kernel = functools.partial(
        _ls_ce_kernel,
        smoothing=float(smoothing),
        ignore_index=ignore_index,
        n_rows=n_rows,
        vocab=vocab,
        tile_n=tile_n,
        tile_v=tile_v,
        use_mxu=use_mxu,
    )

    out = pl.pallas_call(
        kernel,
        out_shape=jax.ShapeDtypeStruct((n_row_tiles, 8, _LANE), jnp.float32),
        grid_spec=pltpu.PrefetchScalarGridSpec(
            num_scalar_prefetch=0,
            grid=(n_row_tiles, n_vocab_tiles),
            in_specs=in_specs,
            out_specs=pl.BlockSpec((1, 8, _LANE), lambda i, j: (i, 0, 0)),
            scratch_shapes=[
                pltpu.VMEM((tile_n, 1), jnp.float32),   # nll accumulator
                pltpu.VMEM((tile_n, 1), jnp.float32),   # smooth accumulator
            ],
        ),
        compiler_params=pltpu.CompilerParams(
            dimension_semantics=("parallel", "arbitrary"),
            vmem_limit_bytes=vmem_limit,
        ),
    )(*args)
    return jnp.sum(out[:, 0, 0])


def _reference(lprobs, target, *, smoothing, ignore_index=None):
    V = lprobs.shape[-1]
    lp2 = lprobs.reshape(-1, V).astype(jnp.float32)
    tgt2 = target.reshape(-1).astype(jnp.int32)
    nll = -jnp.take_along_axis(lp2, tgt2[:, None], axis=-1)[:, 0]
    smooth = -jnp.sum(lp2, axis=-1)
    if ignore_index is not None:
        mask = tgt2 == ignore_index
        nll = jnp.where(mask, 0.0, nll)
        smooth = jnp.where(mask, 0.0, smooth)
    nll_s = jnp.sum(nll)
    smooth_s = jnp.sum(smooth)
    eps_i = smoothing / V
    return (1.0 - smoothing) * nll_s + eps_i * smooth_s


if __name__ == "__main__":
    key = jax.random.PRNGKey(0)

    # Test 1: f32, ignore_index, ragged last row tile, single vocab tile.
    B, T, V = 2, 9, 32
    k1, k2, key = jax.random.split(key, 3)
    logits = jax.random.normal(k1, (B, T, V), dtype=jnp.float32)
    lprobs = jax.nn.log_softmax(logits, axis=-1)
    target = jax.random.randint(k2, (B, T), 0, V, dtype=jnp.int32)
    target = target.at[0, 0].set(1).at[1, 3].set(1)
    loss = label_smoothed_cross_entropy(
        lprobs, target, smoothing=0.1, ignore_index=1)
    loss = jax.block_until_ready(loss)
    ref = _reference(lprobs, target, smoothing=0.1, ignore_index=1)
    assert jnp.allclose(loss, ref, rtol=1e-5, atol=1e-3), (loss, ref)

    # Test 2: f32, no ignore_index, forced small tiles -> ragged vocab tile,
    # ragged row tile (VPU smooth path with the ragged-vocab mask).
    B2, T2, V2 = 5, 7, 320
    k3, k4, key = jax.random.split(key, 3)
    logits2 = jax.random.normal(k3, (B2, T2, V2), dtype=jnp.float32)
    lprobs2 = jax.nn.log_softmax(logits2, axis=-1)
    target2 = jax.random.randint(k4, (B2, T2), 0, V2, dtype=jnp.int32)
    loss2 = label_smoothed_cross_entropy(
        lprobs2, target2, smoothing=0.1, ignore_index=None,
        tile_n=16, tile_v=128)
    loss2 = jax.block_until_ready(loss2)
    ref2 = _reference(lprobs2, target2, smoothing=0.1, ignore_index=None)
    assert jnp.allclose(loss2, ref2, rtol=1e-4, atol=5e-2), (loss2, ref2)

    # Test 3: native bf16 lprobs (MXU smooth path), fully aligned tiles.
    B3, T3, V3 = 2, 16, 128
    k5, k6, key = jax.random.split(key, 3)
    logits3 = jax.random.normal(k5, (B3, T3, V3), dtype=jnp.float32)
    lprobs3 = jax.nn.log_softmax(logits3, axis=-1).astype(jnp.bfloat16)
    target3 = jax.random.randint(k6, (B3, T3), 0, V3, dtype=jnp.int32)
    target3 = target3.at[0, 2].set(0)
    loss3 = label_smoothed_cross_entropy(
        lprobs3, target3, smoothing=0.2, ignore_index=0)
    loss3 = jax.block_until_ready(loss3)
    ref3 = _reference(lprobs3, target3, smoothing=0.2, ignore_index=0)
    assert jnp.allclose(loss3, ref3, rtol=1e-3, atol=5e-2), (loss3, ref3)

    # Test 4: bf16 + MXU path with ragged vocab tile, ragged row tile and
    # ignore_index (exercises the pre-matmul lane mask and row masks).
    B4, T4, V4 = 3, 7, 320
    k7, k8, key = jax.random.split(key, 3)
    logits4 = jax.random.normal(k7, (B4, T4, V4), dtype=jnp.float32)
    lprobs4 = jax.nn.log_softmax(logits4, axis=-1).astype(jnp.bfloat16)
    target4 = jax.random.randint(k8, (B4, T4), 0, V4, dtype=jnp.int32)
    target4 = target4.at[0, 1].set(2).at[2, 5].set(2)
    loss4 = label_smoothed_cross_entropy(
        lprobs4, target4, smoothing=0.1, ignore_index=2,
        tile_n=16, tile_v=128)
    loss4 = jax.block_until_ready(loss4)
    ref4 = _reference(lprobs4, target4, smoothing=0.1, ignore_index=2)
    assert jnp.allclose(loss4, ref4, rtol=1e-3, atol=5e-2), (loss4, ref4)

    print("KERNEL_OK")
</pallas_src>

<mosaic_0001>
module attributes {stable_mosaic.version = 11 : i64} {
  func.func @_ls_ce_kernel(%arg0: i32, %arg1: i32, %arg2: memref<16x1xi32, #tpu.memory_space<vmem>>, %arg3: memref<16x32xf32, #tpu.memory_space<vmem>>, %arg4: memref<1x8x128xf32, #tpu.memory_space<vmem>>, %arg5: memref<16x1xf32, #tpu.memory_space<vmem>>, %arg6: memref<16x1xf32, #tpu.memory_space<vmem>>) attributes {dimension_semantics = [#tpu.dimension_semantics<parallel>, #tpu.dimension_semantics<arbitrary>], iteration_bounds = array<i64: 2, 1>, scalar_prefetch = 0 : i64, scratch_operands = 2 : i64, tpu.core_type = #tpu.core_type<tc>, window_params = [{transform_indices = @transform_0, window_bounds = array<i64: 16, 1>}, {transform_indices = @transform_1, window_bounds = array<i64: 16, 32>}, {transform_indices = @transform_2, window_bounds = array<i64: 1, 8, 128>}]} {
    %c0_i32 = arith.constant 0 : i32
    %0 = arith.cmpi eq, %arg1, %c0_i32 : i32
    %1 = arith.extui %0 : i1 to i32
    %c0_i32_0 = arith.constant 0 : i32
    %2 = arith.cmpi ne, %1, %c0_i32_0 : i32
    scf.if %2 {
      %cst_20 = arith.constant 0.000000e+00 : f32
      %44 = vector.broadcast %cst_20 : f32 to vector<16x1xf32>
      %c0_21 = arith.constant 0 : index
      %c0_22 = arith.constant 0 : index
      %45 = vector.load %arg5[%c0_21, %c0_22] : memref<16x1xf32, #tpu.memory_space<vmem>>, vector<16x1xf32>
      tpu.vector_store %arg5[%c0_21, %c0_22], %44 {strides = array<i32>} : memref<16x1xf32, #tpu.memory_space<vmem>>, vector<16x1xf32>,
      %cst_23 = arith.constant 0.000000e+00 : f32
      %46 = vector.broadcast %cst_23 : f32 to vector<16x1xf32>
      %c0_24 = arith.constant 0 : index
      %c0_25 = arith.constant 0 : index
      %47 = vector.load %arg6[%c0_24, %c0_25] : memref<16x1xf32, #tpu.memory_space<vmem>>, vector<16x1xf32>
      tpu.vector_store %arg6[%c0_24, %c0_25], %46 {strides = array<i32>} : memref<16x1xf32, #tpu.memory_space<vmem>>, vector<16x1xf32>,
    } else {
    }
    %c0 = arith.constant 0 : index
    %c0_1 = arith.constant 0 : index
    %3 = vector.load %arg3[%c0, %c0_1] : memref<16x32xf32, #tpu.memory_space<vmem>>, vector<16x32xf32>
    %c0_2 = arith.constant 0 : index
    %c0_3 = arith.constant 0 : index
    %4 = vector.load %arg2[%c0_2, %c0_3] : memref<16x1xi32, #tpu.memory_space<vmem>>, vector<16x1xi32>
    %c32_i32 = arith.constant 32 : i32
    %5 = arith.muli %arg1, %c32_i32 : i32
    %6 = tpu.iota {dimensions = array<i32: 1>} : vector<1x32xi32>
    %7 = vector.broadcast %5 : i32 to vector<16x1xi32>
    %8 = arith.subi %4, %7 : vector<16x1xi32>
    %9 = vector.broadcast %6 : vector<1x32xi32> to vector<16x32xi32>
    %10 = vector.broadcast %8 : vector<16x1xi32> to vector<16x32xi32>
    %11 = arith.cmpi eq, %9, %10 : vector<16x32xi32>
    %cst = arith.constant 0.000000e+00 : f32
    %12 = vector.broadcast %cst : f32 to vector<16x32xf32>
    %13 = arith.select %11, %3, %12 : vector<16x32xi1>, vector<16x32xf32>
    %cst_4 = arith.constant dense<0.000000e+00> : vector<16xf32>
    %14 = vector.multi_reduction <add>, %13, %cst_4 [1] : vector<16x32xf32> to vector<16xf32>
    %15 = vector.shape_cast %14 : vector<16xf32> to vector<16x1xf32>
    %cst_5 = arith.constant 0.000000e+00 : f32
    %16 = vector.broadcast %cst_5 : f32 to vector<16x1xf32>
    %17 = arith.subf %16, %15 : vector<16x1xf32>
    %cst_6 = arith.constant dense<0.000000e+00> : vector<16xf32>
    %18 = vector.multi_reduction <add>, %3, %cst_6 [1] : vector<16x32xf32> to vector<16xf32>
    %19 = vector.shape_cast %18 : vector<16xf32> to vector<16x1xf32>
    %cst_7 = arith.constant 0.000000e+00 : f32
    %20 = vector.broadcast %cst_7 : f32 to vector<16x1xf32>
    %21 = arith.subf %20, %19 : vector<16x1xf32>
    %c16_i32 = arith.constant 16 : i32
    %22 = arith.muli %arg0, %c16_i32 : i32
    %23 = tpu.iota {dimensions = array<i32: 0>} : vector<16x1xi32>
    %24 = vector.broadcast %22 : i32 to vector<16x1xi32>
    %25 = arith.addi %24, %23 : vector<16x1xi32>
    %c18_i32 = arith.constant 18 : i32
    %26 = vector.broadcast %c18_i32 : i32 to vector<16x1xi32>
    %27 = arith.cmpi slt, %25, %26 : vector<16x1xi32>
    %c1_i32 = arith.constant 1 : i32
    %28 = vector.broadcast %c1_i32 : i32 to vector<16x1xi32>
    %29 = arith.cmpi ne, %4, %28 : vector<16x1xi32>
    %30 = arith.andi %27, %29 : vector<16x1xi1>
    %c0_8 = arith.constant 0 : index
    %c0_9 = arith.constant 0 : index
    %31 = vector.load %arg5[%c0_8, %c0_9] : memref<16x1xf32, #tpu.memory_space<vmem>>, vector<16x1xf32>
    %cst_10 = arith.constant 0.000000e+00 : f32
    %32 = vector.broadcast %cst_10 : f32 to vector<16x1xf32>
    %33 = arith.select %30, %17, %32 : vector<16x1xi1>, vector<16x1xf32>
    %34 = arith.addf %31, %33 : vector<16x1xf32>
    %c0_11 = arith.constant 0 : index
    %c0_12 = arith.constant 0 : index
    %35 = vector.load %arg5[%c0_11, %c0_12] : memref<16x1xf32, #tpu.memory_space<vmem>>, vector<16x1xf32>
    tpu.vector_store %arg5[%c0_11, %c0_12], %34 {strides = array<i32>} : memref<16x1xf32, #tpu.memory_space<vmem>>, vector<16x1xf32>,
    %c0_13 = arith.constant 0 : index
    %c0_14 = arith.constant 0 : index
    %36 = vector.load %arg6[%c0_13, %c0_14] : memref<16x1xf32, #tpu.memory_space<vmem>>, vector<16x1xf32>
    %cst_15 = arith.constant 0.000000e+00 : f32
    %37 = vector.broadcast %cst_15 : f32 to vector<16x1xf32>
    %38 = arith.select %30, %21, %37 : vector<16x1xi1>, vector<16x1xf32>
    %39 = arith.addf %36, %38 : vector<16x1xf32>
    %c0_16 = arith.constant 0 : index
    %c0_17 = arith.constant 0 : index
    %40 = vector.load %arg6[%c0_16, %c0_17] : memref<16x1xf32, #tpu.memory_space<vmem>>, vector<16x1xf32>
    tpu.vector_store %arg6[%c0_16, %c0_17], %39 {strides = array<i32>} : memref<16x1xf32, #tpu.memory_space<vmem>>, vector<16x1xf32>,
    %c0_i32_18 = arith.constant 0 : i32
    %41 = arith.cmpi eq, %arg1, %c0_i32_18 : i32
    %42 = arith.extui %41 : i1 to i32
    %c0_i32_19 = arith.constant 0 : i32
    %43 = arith.cmpi ne, %42, %c0_i32_19 : i32
    scf.if %43 {
      %c0_20 = arith.constant 0 : index
      %c0_21 = arith.constant 0 : index
      %44 = vector.load %arg5[%c0_20, %c0_21] : memref<16x1xf32, #tpu.memory_space<vmem>>, vector<16x1xf32>
      %45 = vector.shape_cast %44 : vector<16x1xf32> to vector<1x16x1xf32>
      %cst_22 = arith.constant dense<0.000000e+00> : vector<1xf32>
      %46 = vector.multi_reduction <add>, %45, %cst_22 [1, 2] : vector<1x16x1xf32> to vector<1xf32>
      %47 = vector.shape_cast %46 : vector<1xf32> to vector<1x1x1xf32>
      %48 = vector.extract %47[0, 0, 0] : f32 from vector<1x1x1xf32>
      %cst_23 = arith.constant 0.899999976 : f32
      %49 = arith.mulf %cst_23, %48 : f32
      %c0_24 = arith.constant 0 : index
      %c0_25 = arith.constant 0 : index
      %50 = vector.load %arg6[%c0_24, %c0_25] : memref<16x1xf32, #tpu.memory_space<vmem>>, vector<16x1xf32>
      %51 = vector.shape_cast %50 : vector<16x1xf32> to vector<1x16x1xf32>
      %cst_26 = arith.constant dense<0.000000e+00> : vector<1xf32>
      %52 = vector.multi_reduction <add>, %51, %cst_26 [1, 2] : vector<1x16x1xf32> to vector<1xf32>
      %53 = vector.shape_cast %52 : vector<1xf32> to vector<1x1x1xf32>
      %54 = vector.extract %53[0, 0, 0] : f32 from vector<1x1x1xf32>
      %cst_27 = arith.constant 3.125000e-03 : f32
      %55 = arith.mulf %cst_27, %54 : f32
      %56 = arith.addf %49, %55 : f32
      %cst_28 = arith.constant 0.000000e+00 : f32
      %57 = vector.broadcast %cst_28 : f32 to vector<1x8x128xf32>
      %58 = vector.broadcast %56 : f32 to vector<1x8x128xf32>
      %59 = arith.addf %57, %58 : vector<1x8x128xf32>
      %c0_29 = arith.constant 0 : index
      %c0_30 = arith.constant 0 : index
      %c0_31 = arith.constant 0 : index
      %60 = vector.load %arg4[%c0_29, %c0_30, %c0_31] : memref<1x8x128xf32, #tpu.memory_space<vmem>>, vector<1x8x128xf32>
      tpu.vector_store %arg4[%c0_29, %c0_30, %c0_31], %59 {strides = array<i32>} : memref<1x8x128xf32, #tpu.memory_space<vmem>>, vector<1x8x128xf32>,
    } else {
    }
    return
  }
  func.func @transform_0(%arg0: i32, %arg1: i32) -> (i32, i32) {
    %c0_i32 = arith.constant 0 : i32
    %c0_i32_0 = arith.constant 0 : i32
    return %arg0, %c0_i32 : i32, i32
  }
  func.func @transform_1(%arg0: i32, %arg1: i32) -> (i32, i32) {
    %c0_i32 = arith.constant 0 : i32
    return %arg0, %arg1 : i32, i32
  }
  func.func @transform_2(%arg0: i32, %arg1: i32) -> (i32, i32, i32) {
    %c0_i32 = arith.constant 0 : i32
    %c0_i32_0 = arith.constant 0 : i32
    %c0_i32_1 = arith.constant 0 : i32
    return %arg0, %c0_i32, %c0_i32_0 : i32, i32, i32
  }
}

</mosaic_0001>

<llo_original>
// kernel: tpu_custom_call.1
$region0: #{tpu_custom_call.1}
  #allocation0 [shape = 'u32[]', space=smem, size = 0x4, offset = 0x4, fixed_abs, tag = 'smem constant byte address 0x4 - core index']
  #allocation1 [shape = 'u32[144,128]{1,0:T(1,128)}', space=vmem, size = 0x12000, scoped, tag = 'internal scratch']
  #allocation2 [shape = 'f32[16,1]{1,0:T(8,128)}', space=vmem, size = 0x2000, scoped, tag = 'scratch operand']
  #allocation3 [shape = 'f32[16,1]{1,0:T(8,128)}', space=vmem, size = 0x2000, scoped, tag = 'scratch operand']
  %s0 = inlined_call_operand.vmem [shape: s32[18,1], index: 0, kind: input, shape index: {}]
  %s1 = inlined_call_operand.vmem [shape: f32[18,32], index: 1, kind: input, shape index: {}]
  %s2 = inlined_call_operand.hbm [shape: f32[2,8,128], index: 2, kind: output, shape index: {}]
  %s3 = sld [smem:[#allocation0]]
  $region49: #{tpu_custom_call.1} parent=0
    _
  %s5 = ssub.s32 1, %s3
  %s6 = scalar_select 0, %s5, %s3
  $region1: #{tpu_custom_call.1} parent=0
    #allocation4 [shape = 'u8[8192]{0}', space=vmem, size = 0x2000, scoped, tag = 'output window, operand 0']
    #allocation5 [shape = 's32[2]{0}', space=sflag, size = 0x8, scoped, tag = 'scoped memory for tpu_custom_call.1']
    %7 = vsyncpa [#allocation5], 0
    %s8 = scalar_lea.sflag [#allocation5], 1
    %9 = vsyncpa %s8, 0
    loop: start=0, step=1, limit=4
    $region2: #{tpu_custom_call.1} parent=1 // loop_pre_header
      _
    $region3: #{tpu_custom_call.1} parent=1 // loop_header
      %s11 = sphi 0, %s15
      %p12 = scmp.ge.s32.totalorder %s11, 4
      %s18 = sphi 0, %s30
      %s19 = sphi 0, %s26
      %s20 = sphi 0, %s18
      %s21 = sphi 0, %s19
      %s22 = sphi 0, %s20
      %s23 = sphi 0, %s21
      %s33 = sphi 0, %s35
      %s36 = sphi 0, %s33
      %s37 = sphi 0, %s36
      %s53 = sphi 0, %s37
      %s61 = sphi 0, %s63
      %s64 = sphi 0, %s61
      %s65 = sphi 0, %s64
      %s81 = sphi 0, %s65
      %s87 = sphi 0, %s89
      %s90 = sphi 0, %s87
      %s91 = sphi 0, %s90
      %s107 = sphi 0, %s91
    $region4: #{tpu_custom_call.1} parent=1 // loop_header_branch
      %14 = sbr.rel (%p12) target = $region8
    $region5: #{tpu_custom_call.1} parent=1 // loop_body
      %s16 = ssub.s32 %s11, 1
      %s17 = ssub.s32 %s11, 2
      %s24 = sadd.s32 1, %s19
      %p25 = scmp.ge.s32.totalorder %s24, 1
      %s26 = scalar_select %p25, 0, %s24
      %s27 = sadd.s32 1, %s18
      %s28 = scalar_select %p25, %s27, %s18
      %p29 = scmp.ge.s32.totalorder %s28, 2
      %s30 = scalar_select %p29, 0, %s28
      %s31 = ssub.s32 %s18, %s30
      %p32 = scmp.eq.s32.totalorder %s31, 0
      %s34 = sadd.s32 %s33, 1
      %s35 = scalar_select %p32, %s33, %s34
      %p38 = pneg %p32
      %p39 = scmp.eq.s32.totalorder %s11, 1
      %p40 = por %p38, %p39
      %p41 = scmp.ne.s32.totalorder %s33, %s36
      %p42 = scmp.eq.s32.totalorder %s11, 0
      %p43 = por %p41, %p42
      %p44 = scmp.ne.s32.totalorder %s33, %s36
      %p45 = scmp.eq.s32.totalorder %s16, 1
      %p46 = por %p44, %p45
      %p47 = scmp.ne.s32.totalorder %s36, %s37
      %p48 = scmp.eq.s32.totalorder %s16, 0
      %p49 = por %p47, %p48
      %p50 = scmp.ne.s32.totalorder %s36, %s37
      %p51 = scmp.eq.s32.totalorder %s17, 1
      %p52 = por %p50, %p51
      %p54 = scmp.ne.s32.totalorder %s37, %s53
      %p55 = scmp.eq.s32.totalorder %s17, 0
      %p56 = por %p54, %p55
      %s57 = ssub.s32 %s18, %s30
      %s58 = ssub.s32 %s19, %s26
      %s59 = sor.u32 %s57, %s58
      %p60 = scmp.eq.s32.totalorder %s59, 0
      %s62 = sadd.s32 %s61, 1
      %s63 = scalar_select %p60, %s61, %s62
      %p66 = pneg %p60
      %p67 = scmp.eq.s32.totalorder %s11, 1
      %p68 = por %p66, %p67
      %p69 = scmp.ne.s32.totalorder %s61, %s64
      %p70 = scmp.eq.s32.totalorder %s11, 0
      %p71 = por %p69, %p70
      %p72 = scmp.ne.s32.totalorder %s61, %s64
      %p73 = scmp.eq.s32.totalorder %s16, 1
      %p74 = por %p72, %p73
      %p75 = scmp.ne.s32.totalorder %s64, %s65
      %p76 = scmp.eq.s32.totalorder %s16, 0
      %p77 = por %p75, %p76
      %p78 = scmp.ne.s32.totalorder %s64, %s65
      %p79 = scmp.eq.s32.totalorder %s17, 1
      %p80 = por %p78, %p79
      %p82 = scmp.ne.s32.totalorder %s65, %s81
      %p83 = scmp.eq.s32.totalorder %s17, 0
      %p84 = por %p82, %p83
      %s85 = ssub.s32 %s18, %s30
      %p86 = scmp.eq.s32.totalorder %s85, 0
      %s88 = sadd.s32 %s87, 1
      %s89 = scalar_select %p86, %s87, %s88
      %p92 = pneg %p86
      %p93 = scmp.eq.s32.totalorder %s11, 1
      %p94 = por %p92, %p93
      %p95 = scmp.ne.s32.totalorder %s87, %s90
      %p96 = scmp.eq.s32.totalorder %s11, 0
      %p97 = por %p95, %p96
      %p98 = scmp.ne.s32.totalorder %s87, %s90
      %p99 = scmp.eq.s32.totalorder %s16, 1
      %p100 = por %p98, %p99
      %p101 = scmp.ne.s32.totalorder %s90, %s91
      %p102 = scmp.eq.s32.totalorder %s16, 0
      %p103 = por %p101, %p102
      %p104 = scmp.ne.s32.totalorder %s90, %s91
      %p105 = scmp.eq.s32.totalorder %s17, 1
      %p106 = por %p104, %p105
      %p108 = scmp.ne.s32.totalorder %s91, %s107
      %p109 = scmp.eq.s32.totalorder %s17, 0
      %p110 = por %p108, %p109
      %p111 = scmp.le.s32.totalorder 1, %s11
      %p112 = scmp.lt.s32.totalorder %s11, 3
      %p113 = pnand %p111, %p112
      %p114 = pneg %p113
      // Predicated region
      $region9: #{tpu_custom_call.1} parent=5 // pred_check
        _
      $region10: #{tpu_custom_call.1} parent=5 // pred_check_branch
        %116 = sbr.rel (%p113) target = $region12
      $region11: #{tpu_custom_call.1} parent=5 // pred_region
        %s117 = ssub.s32 %s11, 1
      $region12: #{tpu_custom_call.1} parent=5 // pred_fallthru
        _
      %p118 = scmp.lt.s32.totalorder %s11, 2
      // Predicated region
      $region13: #{tpu_custom_call.1} parent=5 // pred_check
        %p119 = pneg %p118
      $region14: #{tpu_custom_call.1} parent=5 // pred_check_branch
        %121 = sbr.rel (%p119) target = $region16
      $region15: #{tpu_custom_call.1} parent=5 // pred_region
        // Predicated region
        $region17: #{tpu_custom_call.1} parent=15 // pred_check
          %p122 = pneg %p43
        $region18: #{tpu_custom_call.1} parent=15 // pred_check_branch
          %124 = sbr.rel (%p122) target = $region20
        $region19: #{tpu_custom_call.1} parent=15 // pred_region
          %s125 = smul.u32 2, %s18
          %s126 = ssub.s32 3, %s125
          %p127 = scmp.lt.s32.totalorder %s126, 2
          %s128 = scalar_select %p127, %s126, 2
          %s129 = smul.u32 128, %s128
          %p130 = scmp.lt.s32.totalorder %s125, 2
          %s131 = scalar_select %p130, %s125, 2
          %s132 = smul.addr %s131, 8
          %s133 = scalar_lea.vmem %s0, %s132
          %s134 = smul.u32 2, %s18
          %s135 = ssub.s32 3, %s134
          %p136 = scmp.lt.s32.totalorder %s135, 2
          %s137 = scalar_select %p136, %s135, 2
          %s138 = smul.u32 128, %s137
        $region20: #{tpu_custom_call.1} parent=15 // pred_fallthru
          _
        // Predicated region
        $region21: #{tpu_custom_call.1} parent=15 // pred_check
          %p139 = pneg %p71
        $region22: #{tpu_custom_call.1} parent=15 // pred_check_branch
          %141 = sbr.rel (%p139) target = $region24
        $region23: #{tpu_custom_call.1} parent=15 // pred_region
          %s142 = smul.u32 2, %s18
          %s143 = ssub.s32 3, %s142
          %p144 = scmp.lt.s32.totalorder %s143, 2
          %s145 = scalar_select %p144, %s143, 2
          %s146 = smul.u32 128, %s145
          %p147 = scmp.lt.s32.totalorder %s142, 2
          %s148 = scalar_select %p147, %s142, 2
          %p149 = scmp.lt.s32.totalorder %s19, 0
          %s150 = scalar_select %p149, %s19, 0
          %s151 = sadd.s32 %s150, %s148
          %s152 = smul.addr %s151, 8
          %s153 = scalar_lea.vmem %s1, %s152
          %s154 = smul.u32 2, %s18
          %s155 = ssub.s32 3, %s154
          %p156 = scmp.lt.s32.totalorder %s155, 2
          %s157 = scalar_select %p156, %s155, 2
          %s158 = smul.u32 128, %s157
        $region24: #{tpu_custom_call.1} parent=15 // pred_fallthru
          _
      $region16: #{tpu_custom_call.1} parent=5 // pred_fallthru
        _
      %p159 = scmp.le.s32.totalorder 1, %s11
      %p160 = scmp.lt.s32.totalorder %s11, 3
      %p161 = pnand %p159, %p160
      %p162 = pneg %p161
      // Predicated region
      $region25: #{tpu_custom_call.1} parent=5 // pred_check
        _
      $region26: #{tpu_custom_call.1} parent=5 // pred_check_branch
        %164 = sbr.rel (%p161) target = $region28
      $region27: #{tpu_custom_call.1} parent=5 // pred_region
        %s165 = ssub.s32 %s11, 1
        %s166 = smul.u32 2, %s20
        %s167 = ssub.s32 3, %s166
        %p168 = scmp.lt.s32.totalorder %s167, 2
        %s169 = scalar_select %p168, %s167, 2
        %s170 = smul.u32 128, %s169
        %p171 = scmp.lt.s32.totalorder %s166, 2
        %s172 = scalar_select %p171, %s166, 2
        %s173 = smul.addr %s172, 8
        %s174 = scalar_lea.vmem %s0, %s173
        %p175 = pneg %p49
        %p176 = pneg %p46
        %s177 = smul.u32 2, %s20
        %s178 = ssub.s32 3, %s177
        %p179 = scmp.lt.s32.totalorder %s178, 2
        %s180 = scalar_select %p179, %s178, 2
        %s181 = smul.u32 128, %s180
        %p182 = scmp.lt.s32.totalorder %s177, 2
        %s183 = scalar_select %p182, %s177, 2
        %p184 = scmp.lt.s32.totalorder %s21, 0
        %s185 = scalar_select %p184, %s21, 0
        %s186 = sadd.s32 %s185, %s183
        %s187 = smul.addr %s186, 8
        %s188 = scalar_lea.vmem %s1, %s187
        %p189 = pneg %p77
        %p190 = pneg %p74
        %p191 = pneg %p103
        %p192 = pneg %p100
        %s193 = sand.u32 %s90, 1
        %s194 = scalar_lea.sflag [#allocation5], %s193
        %s195 = sand.u32 %s90, 1
        %s196 = smul.addr %s195, 8
        %s197 = scalar_lea.vmem [#allocation4], %s196
        %s198 = smul.u32 2, %s20
        %s199 = ssub.s32 3, %s198
        %p200 = scmp.lt.s32.totalorder %s199, 2
        %s201 = scalar_select %p200, %s199, 2
        %s202 = smul.u32 128, %s201
        %p203 = scmp.lt.s32.totalorder %s198, 2
        %s204 = scalar_select %p203, %s198, 2
        %s205 = smul.addr %s204, 8
        %s206 = scalar_lea.vmem %s0, %s205
        %s207 = smul.u32 2, %s20
        %s208 = ssub.s32 3, %s207
        %p209 = scmp.lt.s32.totalorder %s208, 2
        %s210 = scalar_select %p209, %s208, 2
        %s211 = smul.u32 128, %s210
        %s212 = smul.u32 2, %s20
        %s213 = ssub.s32 3, %s212
        %p214 = scmp.lt.s32.totalorder %s213, 2
        %s215 = scalar_select %p214, %s213, 2
        %s216 = smul.u32 128, %s215
        %p217 = scmp.lt.s32.totalorder %s212, 2
        %s218 = scalar_select %p217, %s212, 2
        %p219 = scmp.lt.s32.totalorder %s21, 0
        %s220 = scalar_select %p219, %s21, 0
        %s221 = sadd.s32 %s220, %s218
        %s222 = smul.addr %s221, 8
        %s223 = scalar_lea.vmem %s1, %s222
        %s224 = smul.u32 2, %s20
        %s225 = ssub.s32 3, %s224
        %p226 = scmp.lt.s32.totalorder %s225, 2
        %s227 = scalar_select %p226, %s225, 2
        %s228 = smul.u32 128, %s227
        %p229 = scmp.eq.s32.totalorder %s21, 0
        // Predicated region
        $region29: #{tpu_custom_call.1} parent=27 // pred_check
          %p230 = pneg %p229
        $region30: #{tpu_custom_call.1} parent=27 // pred_check_branch
          %232 = sbr.rel (%p230) target = $region32
        $region31: #{tpu_custom_call.1} parent=27 // pred_region
          %vm233 = vcmask 7168
          %234 = vst.msk [vmem:[#allocation2] sm:$0xff] %vm233, 0.0
          %235 = vst.msk [vmem:[#allocation2 + $0x8] sm:$0xff] %vm233, 0.0
          %236 = vst.msk [vmem:[#allocation3] sm:$0xff] %vm233, 0.0
          %237 = vst.msk [vmem:[#allocation3 + $0x8] sm:$0xff] %vm233, 0.0
        $region32: #{tpu_custom_call.1} parent=27 // pred_fallthru
          _
        %v238 = vld [vmem:[%s223] sm:$0xff]
        %v239 = vld [vmem:[%s223 + $0x8] sm:$0xff]
        %v240 = vld [vmem:[%s206] sm:$0xff]
        %v241 = vld [vmem:[%s206 + $0x8] sm:$0xff]
        %s242 = smul.u32 %s21, 32
        %v243 = vlaneseq
        %v244 = vand.u32 %v243, 127
        %v245 = vstv %s242
        %v246 = vsub.s32 %v240, %v245
        %v247 = vsub.s32 %v241, %v245
        %248 = vset.pattern.permute.xlu0 0
        %249 = vperm.xlu0 %248, %v246
        %v250 = vpop.permute.xlu0 %249
        %251 = vset.pattern.permute.xlu0 0
        %252 = vperm.xlu0 %251, %v247
        %v253 = vpop.permute.xlu0 %252
        %vm254 = vcmp.eq.s32.totalorder %v244, %v250
        %vm255 = vcmp.eq.s32.totalorder %v244, %v253
        %v256 = vsel %vm254, %v238, 0.0
        %v257 = vsel %vm255, %v239, 0.0
        %vm258 = vcmask 261120
        %v259 = vsel %vm258, %v256, 0.0
        %260 = vadd.xlane.f32.xlu0 %v259
        %v261 = vpop.xlane.xlu0 %260
        %v262 = vsel %vm258, %v257, 0.0
        %263 = vadd.xlane.f32.xlu0 %v262
        %v264 = vpop.xlane.xlu0 %263
        %v265 = vsub.f32 0.0, %v261
        %v266 = vsub.f32 0.0, %v264
        %v267 = vsel %vm258, %v238, 0.0
        %268 = vadd.xlane.f32.xlu0 %v267
        %v269 = vpop.xlane.xlu0 %268
        %v270 = vsel %vm258, %v239, 0.0
        %271 = vadd.xlane.f32.xlu0 %v270
        %v272 = vpop.xlane.xlu0 %271
        %v273 = vsub.f32 0.0, %v269
        %v274 = vsub.f32 0.0, %v272
        %s275 = smul.u32 %s20, 16
        %v276 = vlaneseq
        %v277 = vshrl.u32 %v276, 7
        %v278 = vadd.s32 %v277, 8
        %v279 = vstv %s275
        %v280 = vadd.s32 %v279, %v277
        %v281 = vadd.s32 %v279, %v278
        %vm282 = vcmp.lt.s32.totalorder %v280, 18
        %vm283 = vcmp.lt.s32.totalorder %v281, 18
        %vm284 = vcmp.ne.s32.totalorder %v240, 1
        %vm285 = vcmp.ne.s32.totalorder %v241, 1
        %vm286 = vmand %vm282, %vm284
        %vm287 = vmand %vm283, %vm285
        %v288 = vld [vmem:[#allocation2] sm:$0xff]
        %v289 = vld [vmem:[#allocation2 + $0x8] sm:$0xff]
        %v290 = vsel %vm286, %v265, 0.0
        %v291 = vsel %vm287, %v266, 0.0
        %v292 = vadd.f32 %v288, %v290
        %v293 = vadd.f32 %v289, %v291
        %vm294 = vcmask 7168
        %295 = vst.msk [vmem:[#allocation2] sm:$0xff] %vm294, %v292
        %296 = vst.msk [vmem:[#allocation2 + $0x8] sm:$0xff] %vm294, %v293
        %v297 = vld [vmem:[#allocation3] sm:$0xff]
        %v298 = vld [vmem:[#allocation3 + $0x8] sm:$0xff]
        %v299 = vsel %vm286, %v273, 0.0
        %v300 = vsel %vm287, %v274, 0.0
        %v301 = vadd.f32 %v297, %v299
        %v302 = vadd.f32 %v298, %v300
        %303 = vst.msk [vmem:[#allocation3] sm:$0xff] %vm294, %v301
        %304 = vst.msk [vmem:[#allocation3 + $0x8] sm:$0xff] %vm294, %v302
        // Predicated region
        $region33: #{tpu_custom_call.1} parent=27 // pred_check
          %p305 = pneg %p229
        $region34: #{tpu_custom_call.1} parent=27 // pred_check_branch
          %307 = sbr.rel (%p305) target = $region36
        $region35: #{tpu_custom_call.1} parent=27 // pred_region
          %v308 = vld [vmem:[#allocation2] sm:$0xff]
          %v309 = vld [vmem:[#allocation2 + $0x8] sm:$0xff]
          %v310 = vsel %vm294, %v308, 0.0
          %v311 = vsel %vm294, %v309, 0.0
          %v312 = vadd.f32 %v310, %v311
          %313 = vadd.xlane.f32.xlu0 %v312
          %v314 = vpop.xlane.xlu0 %313
          %v315 = vrot.slane %v314, 4
          %v316 = vadd.f32 %v314, %v315
          %v317 = vrot.slane %v316, 2
          %v318 = vadd.f32 %v316, %v317
          %v319 = vrot.slane %v318, 1
          %v320 = vadd.f32 %v318, %v319
          %s321 = vtos %v320
          %s322 = smul.f32 %s321, 0.9
          %v323 = vld [vmem:[#allocation3] sm:$0xff]
          %v324 = vld [vmem:[#allocation3 + $0x8] sm:$0xff]
          %v325 = vsel %vm294, %v323, 0.0
          %v326 = vsel %vm294, %v324, 0.0
          %v327 = vadd.f32 %v325, %v326
          %328 = vadd.xlane.f32.xlu0 %v327
          %v329 = vpop.xlane.xlu0 %328
          %v330 = vrot.slane %v329, 4
          %v331 = vadd.f32 %v329, %v330
          %v332 = vrot.slane %v331, 2
          %v333 = vadd.f32 %v331, %v332
          %v334 = vrot.slane %v333, 1
          %v335 = vadd.f32 %v333, %v334
          %s336 = vtos %v335
          %s337 = smul.f32 %s336, 0.003125
          %s338 = sadd.f32 %s322, %s337
          %v339 = vstv %s338
          %v340 = vadd.f32 %v339, 0.0
          %341 = vst [vmem:[%s197] sm:$0xff] %v340
        $region36: #{tpu_custom_call.1} parent=27 // pred_fallthru
          _
        %s342 = sand.u32 %s90, 1
        %s343 = scalar_lea.sflag [#allocation5], %s342
        %s344 = sand.u32 %s90, 1
        %s345 = smul.addr %s344, 8
        %s346 = scalar_lea.vmem [#allocation4], %s345
        // Predicated region
        $region37: #{tpu_custom_call.1} parent=27 // pred_check
          %p347 = pneg %p100
        $region38: #{tpu_custom_call.1} parent=27 // pred_check_branch
          %349 = sbr.rel (%p347) target = $region40
        $region39: #{tpu_custom_call.1} parent=27 // pred_region
          %s351 = ssub.s32 128, 128
          %352 = vsyncadd %s343, %s351
          %s353 = smul.addr %s20, 128
          %s354 = scalar_lea.hbm %s2, %s353
          %s356 = sshll.u32 %s346, 4
          %s357 = int_to_ptr.vmem [resolvable:$true] %s356
          %359 = dma.vmem_to_hbm [thread:$0]  %s357, 128, %s354, %s343
        $region40: #{tpu_custom_call.1} parent=27 // pred_fallthru
          _
      $region28: #{tpu_custom_call.1} parent=5 // pred_fallthru
        _
      %p360 = scmp.le.s32.totalorder 2, %s11
      // Predicated region
      $region41: #{tpu_custom_call.1} parent=5 // pred_check
        %p361 = pneg %p360
      $region42: #{tpu_custom_call.1} parent=5 // pred_check_branch
        %363 = sbr.rel (%p361) target = $region44
      $region43: #{tpu_custom_call.1} parent=5 // pred_region
        %s364 = ssub.s32 %s11, 2
        // Predicated region
        $region45: #{tpu_custom_call.1} parent=43 // pred_check
          %p365 = pneg %p106
        $region46: #{tpu_custom_call.1} parent=43 // pred_check_branch
          %367 = sbr.rel (%p365) target = $region48
        $region47: #{tpu_custom_call.1} parent=43 // pred_region
          %s368 = sand.u32 %s91, 1
          %s369 = scalar_lea.sflag [#allocation5], %s368
          %s370 = sand.u32 %s91, 1
          %s371 = smul.addr %s370, 8
          %s372 = scalar_lea.vmem [#allocation4], %s371
          %373 = dma.done %s369, 128
        $region48: #{tpu_custom_call.1} parent=43 // pred_fallthru
          _
      $region44: #{tpu_custom_call.1} parent=5 // pred_fallthru
        _
    $region6: #{tpu_custom_call.1} parent=1 // loop_footer
      %s15 = sadd.s32 1, %s11
    $region7: #{tpu_custom_call.1} parent=1 // loop_footer_branch
      %10 = sbr.rel target = $region3
    $region8: #{tpu_custom_call.1} parent=1 // loop_exit
      _
    %374 = vsyncpa [#allocation5], 1
    %s375 = scalar_lea.sflag [#allocation5], 1
    %376 = vsyncpa %s375, 1

</llo_original>
